<compile_context>
chip_gen: v7x
topology: tpu7x:2x2x1
jax: 0.10.0
libtpu: 0.0.40
codegen_flags: <defaults>
</compile_context>

<pallas_src>
import functools

import jax
import jax.numpy as jnp
from jax.experimental import pallas as pl
from jax.experimental.pallas import tpu as pltpu


def _bn_pad_kernel(x_ref, scale_ref, shift_ref, o_ref, *, pad):
    # x_ref:     (H,  W,  gc)   input planes, channels on the lane axis
    # scale_ref: (1,  1,  gc)   per-channel scale  (weight / sqrt(var + eps))
    # shift_ref: (1,  1,  gc)   per-channel shift  (== pad value in eval mode)
    # o_ref:     (Ho, Wo, gc)   padded output planes
    h, w, gc = x_ref.shape
    s = scale_ref[...]                                   # (1, 1, gc) f32
    b = shift_ref[...]                                   # (1, 1, gc) f32
    y = x_ref[...].astype(jnp.float32) * s + b           # (h, w, gc)

    if pad > 0:
        wo = w + 2 * pad
        # Assemble the padded tile in registers: pad-value columns along the
        # sublane (W) axis, then pad-value rows along H; one full-tile store.
        pv_col = jnp.broadcast_to(b, (h, pad, gc))
        y = jnp.concatenate([pv_col, y, pv_col], axis=1)  # (h,  wo, gc)
        pv_row = jnp.broadcast_to(b, (pad, wo, gc))
        y = jnp.concatenate([pv_row, y, pv_row], axis=0)  # (ho, wo, gc)

    o_ref[...] = y.astype(o_ref.dtype)


def _pick_lane_block(nc, h, w, ho, wo, itemsize,
                     target_bytes=4 << 20, min_grid=8):
    """Pick the channel (lane-axis) block size gc, padded NC and a VMEM limit.

    The footprint is estimated from *padded* tile sizes: sublane dim (W / Wo)
    rounded to the dtype's sublane multiple, lane dim rounded to 128, doubled
    for the Pallas double-buffered pipeline, plus the (1,1,gc) scale/shift
    blocks.
    """
    LANE = 128
    sub = 8 * max(1, 4 // itemsize)            # 8 for f32, 16 for bf16, 32 for i8
    rsub = lambda v: -(-v // sub) * sub
    # Padded (in + out) bytes per lane-column of one channel.
    per_lane = (h * rsub(w) + ho * rsub(wo)) * itemsize

    if nc <= LANE:
        gc = nc                                # full-dim block (allowed < 128)
        nc_pad = nc
    else:
        nc_pad_full = -(-nc // LANE) * LANE
        gc = max(LANE, (target_bytes // (per_lane * LANE)) * LANE)
        gc = min(gc, nc_pad_full)
        # Keep enough grid steps for i+1 prefetch / i-1 writeback overlap and
        # for both v7x TensorCores (dimension_semantics=("parallel",)).
        while gc > LANE and -(-nc_pad_full // gc) < min_grid:
            gc -= LANE
        nc_pad = -(-nc // gc) * gc

    gc_lanes = -(-gc // LANE) * LANE
    per_step = per_lane * gc_lanes + 2 * (sub * gc_lanes * 4)  # + scale/shift
    vmem_est = 2 * per_step                                    # double-buffered
    vmem_limit = int(min(max(2 * vmem_est, 32 << 20), 56 << 20))
    return gc, nc_pad, vmem_limit


def _bn_and_pad_lane_dense(x, scale, shift, *, pad):
    """Core kernel. x: (H, W, NC) channels-last; scale/shift: (NC,) f32.

    Returns (H+2p, W+2p, NC).  Call this directly if the surrounding graph
    already supplies channels-last activations (no transposes needed).
    """
    H, W, NC = x.shape
    Ho, Wo = H + 2 * pad, W + 2 * pad
    itemsize = jnp.dtype(x.dtype).itemsize

    gc, nc_pad, vmem_limit = _pick_lane_block(NC, H, W, Ho, Wo, itemsize)

    if nc_pad != NC:
        cpad = nc_pad - NC
        x = jnp.pad(x, ((0, 0), (0, 0), (0, cpad)))
        scale = jnp.pad(scale, (0, cpad))
        shift = jnp.pad(shift, (0, cpad))

    scale3 = scale.reshape(1, 1, nc_pad).astype(jnp.float32)
    shift3 = shift.reshape(1, 1, nc_pad).astype(jnp.float32)

    grid = (nc_pad // gc,)
    kernel = functools.partial(_bn_pad_kernel, pad=pad)

    out = pl.pallas_call(
        kernel,
        out_shape=jax.ShapeDtypeStruct((Ho, Wo, nc_pad), x.dtype),
        grid=grid,
        in_specs=[
            pl.BlockSpec((H, W, gc), lambda g: (0, 0, g)),
            pl.BlockSpec((1, 1, gc), lambda g: (0, 0, g)),
            pl.BlockSpec((1, 1, gc), lambda g: (0, 0, g)),
        ],
        out_specs=pl.BlockSpec((Ho, Wo, gc), lambda g: (0, 0, g)),
        compiler_params=pltpu.CompilerParams(
            dimension_semantics=("parallel",),
            vmem_limit_bytes=vmem_limit),
    )(x, scale3, shift3)

    if nc_pad != NC:
        out = out[:, :, :NC]
    return out


def bn_and_pad(x, weight, bias, running_mean, running_var, *,
               eps=1e-5, pad_pixels=1):
    """Pallas implementation of BNAndPadLayer.forward (eval-mode BN), NCHW."""
    if (weight is None) != (bias is None):
        raise ValueError("weight and bias must both be set (affine=True) or "
                         "both None (affine=False)")

    N, C, H, W = x.shape
    p = int(pad_pixels)
    Ho, Wo = H + 2 * p, W + 2 * p

    # Fold BN into per-channel scale/shift (tiny glue in plain JAX).
    rm = running_mean.astype(jnp.float32)
    rv = running_var.astype(jnp.float32)
    inv_std = 1.0 / jnp.sqrt(rv + eps)
    if weight is not None:
        scale = weight.astype(jnp.float32) * inv_std
        shift = bias.astype(jnp.float32) - rm * scale
    else:                      # affine=False
        scale = inv_std
        shift = -rm * inv_std
    # In eval mode the pad value equals `shift`, so it is not a separate operand.

    NC = N * C
    # Lane-dense layout: channels (N*C) on the lane axis.  The transposes are
    # layout plumbing only; a channels-last graph would skip them entirely.
    x_hwc = jnp.transpose(x, (2, 3, 0, 1)).reshape(H, W, NC)
    scale_nc = jnp.broadcast_to(scale[None, :], (N, C)).reshape(NC)
    shift_nc = jnp.broadcast_to(shift[None, :], (N, C)).reshape(NC)

    out_hwc = _bn_and_pad_lane_dense(x_hwc, scale_nc, shift_nc, pad=p)

    out = out_hwc.reshape(Ho, Wo, N, C).transpose(2, 3, 0, 1)
    return out


def _reference(x, weight, bias, running_mean, running_var, *,
               eps=1e-5, pad_pixels=1):
    """Plain-JAX reference mirroring the PyTorch forward (eval mode)."""
    inv_std = 1.0 / jnp.sqrt(running_var + eps)
    y = (x - running_mean[None, :, None, None]) * inv_std[None, :, None, None]
    y = y * weight[None, :, None, None] + bias[None, :, None, None]
    pv = bias - running_mean * weight * inv_std
    p = pad_pixels
    out = jnp.pad(y, ((0, 0), (0, 0), (p, p), (p, p)))
    pvb = pv[None, :, None, None]
    out = out.at[:, :, 0:p, :].set(pvb)
    out = out.at[:, :, -p:, :].set(pvb)
    out = out.at[:, :, :, 0:p].set(pvb)
    out = out.at[:, :, :, -p:].set(pvb)
    return out


if __name__ == "__main__":
    N, C, H, W = 2, 4, 16, 16
    pad_pixels = 1
    eps = 1e-5

    key = jax.random.PRNGKey(0)
    kx, kw, kb, km, kv = jax.random.split(key, 5)

    x = jax.random.normal(kx, (N, C, H, W), dtype=jnp.float32)
    # Deterministic synthetic BN parameters (affine=True, track_running_stats=True).
    weight = 1.0 + 0.1 * jax.random.normal(kw, (C,), dtype=jnp.float32)
    bias = 0.05 * jax.random.normal(kb, (C,), dtype=jnp.float32)
    running_mean = 0.2 * jax.random.normal(km, (C,), dtype=jnp.float32)
    running_var = 0.5 + jax.random.uniform(kv, (C,), dtype=jnp.float32)

    out = bn_and_pad(x, weight, bias, running_mean, running_var,
                     eps=eps, pad_pixels=pad_pixels)
    out = jax.block_until_ready(out)

    ref = _reference(x, weight, bias, running_mean, running_var,
                     eps=eps, pad_pixels=pad_pixels)

    assert out.shape == (N, C, H + 2 * pad_pixels, W + 2 * pad_pixels)
    assert jnp.allclose(out, ref, atol=1e-5, rtol=1e-5), \
        f"max abs err = {jnp.max(jnp.abs(out - ref))}"

    print("KERNEL_OK")
</pallas_src>

<mosaic_0001>
module attributes {stable_mosaic.version = 11 : i64} {
  func.func @_bn_pad_kernel(%arg0: i32, %arg1: memref<16x16x8xf32, #tpu.memory_space<vmem>>, %arg2: memref<1x1x8xf32, #tpu.memory_space<vmem>>, %arg3: memref<1x1x8xf32, #tpu.memory_space<vmem>>, %arg4: memref<18x18x8xf32, #tpu.memory_space<vmem>>) attributes {dimension_semantics = [#tpu.dimension_semantics<parallel>], iteration_bounds = array<i64: 1>, scalar_prefetch = 0 : i64, scratch_operands = 0 : i64, tpu.core_type = #tpu.core_type<tc>, window_params = [{transform_indices = @transform_0, window_bounds = array<i64: 16, 16, 8>}, {transform_indices = @transform_1, window_bounds = array<i64: 1, 1, 8>}, {transform_indices = @transform_2, window_bounds = array<i64: 1, 1, 8>}, {transform_indices = @transform_3, window_bounds = array<i64: 18, 18, 8>}]} {
    %c0 = arith.constant 0 : index
    %c0_0 = arith.constant 0 : index
    %c0_1 = arith.constant 0 : index
    %0 = vector.load %arg2[%c0, %c0_0, %c0_1] : memref<1x1x8xf32, #tpu.memory_space<vmem>>, vector<1x1x8xf32>
    %c0_2 = arith.constant 0 : index
    %c0_3 = arith.constant 0 : index
    %c0_4 = arith.constant 0 : index
    %1 = vector.load %arg3[%c0_2, %c0_3, %c0_4] : memref<1x1x8xf32, #tpu.memory_space<vmem>>, vector<1x1x8xf32>
    %c0_5 = arith.constant 0 : index
    %c0_6 = arith.constant 0 : index
    %c0_7 = arith.constant 0 : index
    %2 = vector.load %arg1[%c0_5, %c0_6, %c0_7] : memref<16x16x8xf32, #tpu.memory_space<vmem>>, vector<16x16x8xf32>
    %3 = vector.broadcast %0 : vector<1x1x8xf32> to vector<16x16x8xf32>
    %4 = arith.mulf %2, %3 : vector<16x16x8xf32>
    %5 = vector.broadcast %1 : vector<1x1x8xf32> to vector<16x16x8xf32>
    %6 = arith.addf %4, %5 : vector<16x16x8xf32>
    %7 = vector.shape_cast %1 : vector<1x1x8xf32> to vector<1x1x8xf32>
    %8 = vector.broadcast %7 : vector<1x1x8xf32> to vector<16x1x8xf32>
    %9 = tpu.concatenate %8, %6, %8 in 1 : vector<16x1x8xf32>, vector<16x16x8xf32>, vector<16x1x8xf32> -> vector<16x18x8xf32>
    %10 = vector.shape_cast %1 : vector<1x1x8xf32> to vector<1x1x8xf32>
    %11 = vector.broadcast %10 : vector<1x1x8xf32> to vector<1x18x8xf32>
    %12 = tpu.concatenate %11, %9, %11 in 0 : vector<1x18x8xf32>, vector<16x18x8xf32>, vector<1x18x8xf32> -> vector<18x18x8xf32>
    %c0_8 = arith.constant 0 : index
    %c0_9 = arith.constant 0 : index
    %c0_10 = arith.constant 0 : index
    %13 = vector.load %arg4[%c0_8, %c0_9, %c0_10] : memref<18x18x8xf32, #tpu.memory_space<vmem>>, vector<18x18x8xf32>
    tpu.vector_store %arg4[%c0_8, %c0_9, %c0_10], %12 {strides = array<i32>} : memref<18x18x8xf32, #tpu.memory_space<vmem>>, vector<18x18x8xf32>,
    return
  }
  func.func @transform_0(%arg0: i32) -> (i32, i32, i32) {
    %c0_i32 = arith.constant 0 : i32
    %c0_i32_0 = arith.constant 0 : i32
    %c0_i32_1 = arith.constant 0 : i32
    return %c0_i32, %c0_i32_0, %arg0 : i32, i32, i32
  }
  func.func @transform_1(%arg0: i32) -> (i32, i32, i32) {
    %c0_i32 = arith.constant 0 : i32
    %c0_i32_0 = arith.constant 0 : i32
    %c0_i32_1 = arith.constant 0 : i32
    return %c0_i32, %c0_i32_0, %arg0 : i32, i32, i32
  }
  func.func @transform_2(%arg0: i32) -> (i32, i32, i32) {
    %c0_i32 = arith.constant 0 : i32
    %c0_i32_0 = arith.constant 0 : i32
    %c0_i32_1 = arith.constant 0 : i32
    return %c0_i32, %c0_i32_0, %arg0 : i32, i32, i32
  }
  func.func @transform_3(%arg0: i32) -> (i32, i32, i32) {
    %c0_i32 = arith.constant 0 : i32
    %c0_i32_0 = arith.constant 0 : i32
    %c0_i32_1 = arith.constant 0 : i32
    return %c0_i32, %c0_i32_0, %arg0 : i32, i32, i32
  }
}

</mosaic_0001>

<llo_original>
// kernel: tpu_custom_call.1
$region0: #{tpu_custom_call.1}
  #allocation0 [shape = 'u32[]', space=smem, size = 0x4, offset = 0x4, fixed_abs, tag = 'smem constant byte address 0x4 - core index']
  #allocation1 [shape = 'u32[144,128]{1,0:T(1,128)}', space=vmem, size = 0x12000, scoped, tag = 'internal scratch']
  %s0 = inlined_call_operand.vmem [shape: f32[16,16,8], index: 0, kind: input, shape index: {}]
  %s1 = inlined_call_operand.vmem [shape: f32[1,1,8], index: 1, kind: input, shape index: {}]
  %s2 = inlined_call_operand.vmem [shape: f32[1,1,8], index: 2, kind: input, shape index: {}]
  %s3 = inlined_call_operand.vmem [shape: f32[18,18,8], index: 3, kind: output, shape index: {}]
  %s4 = sld [smem:[#allocation0]]
  $region22: #{tpu_custom_call.1} parent=0
    _
  %s6 = ssub.s32 1, %s4
  %s7 = scalar_select 0, %s6, %s4
  // Predicated region
  $region2: #{tpu_custom_call.1} parent=0 // pred_check
    _
  $region3: #{tpu_custom_call.1} parent=0 // pred_check_branch
    %9 = sbr.rel (0) target = $region5
  $region4: #{tpu_custom_call.1} parent=0 // pred_region
    _
  $region5: #{tpu_custom_call.1} parent=0 // pred_fallthru
    _
  // Predicated region
  $region6: #{tpu_custom_call.1} parent=0 // pred_check
    _
  $region7: #{tpu_custom_call.1} parent=0 // pred_check_branch
    %11 = sbr.rel (0) target = $region9
  $region8: #{tpu_custom_call.1} parent=0 // pred_region
    _
  $region9: #{tpu_custom_call.1} parent=0 // pred_fallthru
    _
  // Predicated region
  $region10: #{tpu_custom_call.1} parent=0 // pred_check
    _
  $region11: #{tpu_custom_call.1} parent=0 // pred_check_branch
    %13 = sbr.rel (0) target = $region13
  $region12: #{tpu_custom_call.1} parent=0 // pred_region
    _
  $region13: #{tpu_custom_call.1} parent=0 // pred_fallthru
    _
  %v14 = vld [vmem:[%s1] sm:$0x1]
  %v15 = vld [vmem:[%s2] sm:$0x1]
  %v16 = vld [vmem:[%s0] sm:$0xff]
  %v17 = vld [vmem:[%s0 + $0x8] sm:$0xff]
  %v18 = vld [vmem:[%s0 + $0x10] sm:$0xff]
  %v19 = vld [vmem:[%s0 + $0x18] sm:$0xff]
  %v20 = vld [vmem:[%s0 + $0x20] sm:$0xff]
  %v21 = vld [vmem:[%s0 + $0x28] sm:$0xff]
  %v22 = vld [vmem:[%s0 + $0x30] sm:$0xff]
  %v23 = vld [vmem:[%s0 + $0x38] sm:$0xff]
  %v24 = vld [vmem:[%s0 + $0x40] sm:$0xff]
  %v25 = vld [vmem:[%s0 + $0x48] sm:$0xff]
  %v26 = vld [vmem:[%s0 + $0x50] sm:$0xff]
  %v27 = vld [vmem:[%s0 + $0x58] sm:$0xff]
  %v28 = vld [vmem:[%s0 + $0x60] sm:$0xff]
  %v29 = vld [vmem:[%s0 + $0x68] sm:$0xff]
  %v30 = vld [vmem:[%s0 + $0x70] sm:$0xff]
  %v31 = vld [vmem:[%s0 + $0x78] sm:$0xff]
  %v32 = vld [vmem:[%s0 + $0x80] sm:$0xff]
  %v33 = vld [vmem:[%s0 + $0x88] sm:$0xff]
  %v34 = vld [vmem:[%s0 + $0x90] sm:$0xff]
  %v35 = vld [vmem:[%s0 + $0x98] sm:$0xff]
  %v36 = vld [vmem:[%s0 + $0xa0] sm:$0xff]
  %v37 = vld [vmem:[%s0 + $0xa8] sm:$0xff]
  %v38 = vld [vmem:[%s0 + $0xb0] sm:$0xff]
  %v39 = vld [vmem:[%s0 + $0xb8] sm:$0xff]
  %v40 = vld [vmem:[%s0 + $0xc0] sm:$0xff]
  %v41 = vld [vmem:[%s0 + $0xc8] sm:$0xff]
  %v42 = vld [vmem:[%s0 + $0xd0] sm:$0xff]
  %v43 = vld [vmem:[%s0 + $0xd8] sm:$0xff]
  %v44 = vld [vmem:[%s0 + $0xe0] sm:$0xff]
  %v45 = vld [vmem:[%s0 + $0xe8] sm:$0xff]
  %v46 = vld [vmem:[%s0 + $0xf0] sm:$0xff]
  %v47 = vld [vmem:[%s0 + $0xf8] sm:$0xff]
  %v49 = vlaneseq
  %v50 = vshrl.u32 %v49, 7
  %v51 = vsub.s32 0, %v50
  %v52 = vrot.slane %v14, %v51
  %v54 = vmul.f32 %v16, %v52
  %v55 = vmul.f32 %v17, %v52
  %v56 = vmul.f32 %v18, %v52
  %v57 = vmul.f32 %v19, %v52
  %v58 = vmul.f32 %v20, %v52
  %v59 = vmul.f32 %v21, %v52
  %v60 = vmul.f32 %v22, %v52
  %v61 = vmul.f32 %v23, %v52
  %v62 = vmul.f32 %v24, %v52
  %v63 = vmul.f32 %v25, %v52
  %v64 = vmul.f32 %v26, %v52
  %v65 = vmul.f32 %v27, %v52
  %v66 = vmul.f32 %v28, %v52
  %v67 = vmul.f32 %v29, %v52
  %v68 = vmul.f32 %v30, %v52
  %v69 = vmul.f32 %v31, %v52
  %v70 = vmul.f32 %v32, %v52
  %v71 = vmul.f32 %v33, %v52
  %v72 = vmul.f32 %v34, %v52
  %v73 = vmul.f32 %v35, %v52
  %v74 = vmul.f32 %v36, %v52
  %v75 = vmul.f32 %v37, %v52
  %v76 = vmul.f32 %v38, %v52
  %v77 = vmul.f32 %v39, %v52
  %v78 = vmul.f32 %v40, %v52
  %v79 = vmul.f32 %v41, %v52
  %v80 = vmul.f32 %v42, %v52
  %v81 = vmul.f32 %v43, %v52
  %v82 = vmul.f32 %v44, %v52
  %v83 = vmul.f32 %v45, %v52
  %v84 = vmul.f32 %v46, %v52
  %v85 = vmul.f32 %v47, %v52
  %v87 = vlaneseq
  %v88 = vshrl.u32 %v87, 7
  %v89 = vsub.s32 0, %v88
  %v90 = vrot.slane %v15, %v89
  %v92 = vadd.f32 %v54, %v90
  %v93 = vadd.f32 %v55, %v90
  %v94 = vadd.f32 %v56, %v90
  %v95 = vadd.f32 %v57, %v90
  %v96 = vadd.f32 %v58, %v90
  %v97 = vadd.f32 %v59, %v90
  %v98 = vadd.f32 %v60, %v90
  %v99 = vadd.f32 %v61, %v90
  %v100 = vadd.f32 %v62, %v90
  %v101 = vadd.f32 %v63, %v90
  %v102 = vadd.f32 %v64, %v90
  %v103 = vadd.f32 %v65, %v90
  %v104 = vadd.f32 %v66, %v90
  %v105 = vadd.f32 %v67, %v90
  %v106 = vadd.f32 %v68, %v90
  %v107 = vadd.f32 %v69, %v90
  %v108 = vadd.f32 %v70, %v90
  %v109 = vadd.f32 %v71, %v90
  %v110 = vadd.f32 %v72, %v90
  %v111 = vadd.f32 %v73, %v90
  %v112 = vadd.f32 %v74, %v90
  %v113 = vadd.f32 %v75, %v90
  %v114 = vadd.f32 %v76, %v90
  %v115 = vadd.f32 %v77, %v90
  %v116 = vadd.f32 %v78, %v90
  %v117 = vadd.f32 %v79, %v90
  %v118 = vadd.f32 %v80, %v90
  %v119 = vadd.f32 %v81, %v90
  %v120 = vadd.f32 %v82, %v90
  %v121 = vadd.f32 %v83, %v90
  %v122 = vadd.f32 %v84, %v90
  %v123 = vadd.f32 %v85, %v90
  %vm156 = vcmask 1040384
  %v157 = vrot.slane %v92, 7
  %v158 = vrot.slane %v93, 7
  %v159 = vsel %vm156, %v157, %v158
  %v160 = vrot.slane %v94, 7
  %v161 = vrot.slane %v95, 7
  %v162 = vsel %vm156, %v160, %v161
  %v163 = vrot.slane %v96, 7
  %v164 = vrot.slane %v97, 7
  %v165 = vsel %vm156, %v163, %v164
  %v166 = vrot.slane %v98, 7
  %v167 = vrot.slane %v99, 7
  %v168 = vsel %vm156, %v166, %v167
  %v169 = vrot.slane %v100, 7
  %v170 = vrot.slane %v101, 7
  %v171 = vsel %vm156, %v169, %v170
  %v172 = vrot.slane %v102, 7
  %v173 = vrot.slane %v103, 7
  %v174 = vsel %vm156, %v172, %v173
  %v175 = vrot.slane %v104, 7
  %v176 = vrot.slane %v105, 7
  %v177 = vsel %vm156, %v175, %v176
  %v178 = vrot.slane %v106, 7
  %v179 = vrot.slane %v107, 7
  %v180 = vsel %vm156, %v178, %v179
  %v181 = vrot.slane %v108, 7
  %v182 = vrot.slane %v109, 7
  %v183 = vsel %vm156, %v181, %v182
  %v184 = vrot.slane %v110, 7
  %v185 = vrot.slane %v111, 7
  %v186 = vsel %vm156, %v184, %v185
  %v187 = vrot.slane %v112, 7
  %v188 = vrot.slane %v113, 7
  %v189 = vsel %vm156, %v187, %v188
  %v190 = vrot.slane %v114, 7
  %v191 = vrot.slane %v115, 7
  %v192 = vsel %vm156, %v190, %v191
  %v193 = vrot.slane %v116, 7
  %v194 = vrot.slane %v117, 7
  %v195 = vsel %vm156, %v193, %v194
  %v196 = vrot.slane %v118, 7
  %v197 = vrot.slane %v119, 7
  %v198 = vsel %vm156, %v196, %v197
  %v199 = vrot.slane %v120, 7
  %v200 = vrot.slane %v121, 7
  %v201 = vsel %vm156, %v199, %v200
  %v202 = vrot.slane %v122, 7
  %v203 = vrot.slane %v123, 7
  %v204 = vsel %vm156, %v202, %v203
  %v253 = vsel %vm156, %v15, %v157
  %v254 = vsel %vm156, %v15, %v160
  %v255 = vsel %vm156, %v15, %v163
  %v256 = vsel %vm156, %v15, %v166
  %v257 = vsel %vm156, %v15, %v169
  %v258 = vsel %vm156, %v15, %v172
  %v259 = vsel %vm156, %v15, %v175
  %v260 = vsel %vm156, %v15, %v178
  %v261 = vsel %vm156, %v15, %v181
  %v262 = vsel %vm156, %v15, %v184
  %v263 = vsel %vm156, %v15, %v187
  %v264 = vsel %vm156, %v15, %v190
  %v265 = vsel %vm156, %v15, %v193
  %v266 = vsel %vm156, %v15, %v196
  %v267 = vsel %vm156, %v15, %v199
  %v268 = vsel %vm156, %v15, %v202
  %v269 = vsel %vm156, %v158, %v90
  %v270 = vsel %vm156, %v161, %v90
  %v271 = vsel %vm156, %v164, %v90
  %v272 = vsel %vm156, %v167, %v90
  %v273 = vsel %vm156, %v170, %v90
  %v274 = vsel %vm156, %v173, %v90
  %v275 = vsel %vm156, %v176, %v90
  %v276 = vsel %vm156, %v179, %v90
  %v277 = vsel %vm156, %v182, %v90
  %v278 = vsel %vm156, %v185, %v90
  %v279 = vsel %vm156, %v188, %v90
  %v280 = vsel %vm156, %v191, %v90
  %v281 = vsel %vm156, %v194, %v90
  %v282 = vsel %vm156, %v197, %v90
  %v283 = vsel %vm156, %v200, %v90
  %v284 = vsel %vm156, %v203, %v90
  %vm285 = vcmask 64512
  %286 = vst.msk [vmem:[%s3] sm:$0xff] %vm285, %v90
  %287 = vst.msk [vmem:[%s3 + $0x8] sm:$0xff] %vm285, %v90
  %vm288 = vcmask 58368
  %289 = vst.msk [vmem:[%s3 + $0x10] sm:$0x3] %vm288, %v90
  %290 = vst.msk [vmem:[%s3 + $0x18] sm:$0xff] %vm285, %v253
  %291 = vst.msk [vmem:[%s3 + $0x20] sm:$0xff] %vm285, %v159
  %292 = vst.msk [vmem:[%s3 + $0x28] sm:$0x3] %vm288, %v269
  %293 = vst.msk [vmem:[%s3 + $0x30] sm:$0xff] %vm285, %v254
  %294 = vst.msk [vmem:[%s3 + $0x38] sm:$0xff] %vm285, %v162
  %295 = vst.msk [vmem:[%s3 + $0x40] sm:$0x3] %vm288, %v270
  %296 = vst.msk [vmem:[%s3 + $0x48] sm:$0xff] %vm285, %v255
  %297 = vst.msk [vmem:[%s3 + $0x50] sm:$0xff] %vm285, %v165
  %298 = vst.msk [vmem:[%s3 + $0x58] sm:$0x3] %vm288, %v271
  %299 = vst.msk [vmem:[%s3 + $0x60] sm:$0xff] %vm285, %v256
  %300 = vst.msk [vmem:[%s3 + $0x68] sm:$0xff] %vm285, %v168
  %301 = vst.msk [vmem:[%s3 + $0x70] sm:$0x3] %vm288, %v272
  %302 = vst.msk [vmem:[%s3 + $0x78] sm:$0xff] %vm285, %v257
  %303 = vst.msk [vmem:[%s3 + $0x80] sm:$0xff] %vm285, %v171
  %304 = vst.msk [vmem:[%s3 + $0x88] sm:$0x3] %vm288, %v273
  %305 = vst.msk [vmem:[%s3 + $0x90] sm:$0xff] %vm285, %v258
  %306 = vst.msk [vmem:[%s3 + $0x98] sm:$0xff] %vm285, %v174
  %307 = vst.msk [vmem:[%s3 + $0xa0] sm:$0x3] %vm288, %v274
  %308 = vst.msk [vmem:[%s3 + $0xa8] sm:$0xff] %vm285, %v259
  %309 = vst.msk [vmem:[%s3 + $0xb0] sm:$0xff] %vm285, %v177
  %310 = vst.msk [vmem:[%s3 + $0xb8] sm:$0x3] %vm288, %v275
  %311 = vst.msk [vmem:[%s3 + $0xc0] sm:$0xff] %vm285, %v260
  %312 = vst.msk [vmem:[%s3 + $0xc8] sm:$0xff] %vm285, %v180
  %313 = vst.msk [vmem:[%s3 + $0xd0] sm:$0x3] %vm288, %v276
  %314 = vst.msk [vmem:[%s3 + $0xd8] sm:$0xff] %vm285, %v261
  %315 = vst.msk [vmem:[%s3 + $0xe0] sm:$0xff] %vm285, %v183
  %316 = vst.msk [vmem:[%s3 + $0xe8] sm:$0x3] %vm288, %v277
  %317 = vst.msk [vmem:[%s3 + $0xf0] sm:$0xff] %vm285, %v262
  %318 = vst.msk [vmem:[%s3 + $0xf8] sm:$0xff] %vm285, %v186
  %319 = vst.msk [vmem:[%s3 + $0x100] sm:$0x3] %vm288, %v278
  %320 = vst.msk [vmem:[%s3 + $0x108] sm:$0xff] %vm285, %v263
  %321 = vst.msk [vmem:[%s3 + $0x110] sm:$0xff] %vm285, %v189
  %322 = vst.msk [vmem:[%s3 + $0x118] sm:$0x3] %vm288, %v279
  %323 = vst.msk [vmem:[%s3 + $0x120] sm:$0xff] %vm285, %v264
  %324 = vst.msk [vmem:[%s3 + $0x128] sm:$0xff] %vm285, %v192
  %325 = vst.msk [vmem:[%s3 + $0x130] sm:$0x3] %vm288, %v280
  %326 = vst.msk [vmem:[%s3 + $0x138] sm:$0xff] %vm285, %v265
  %327 = vst.msk [vmem:[%s3 + $0x140] sm:$0xff] %vm285, %v195
  %328 = vst.msk [vmem:[%s3 + $0x148] sm:$0x3] %vm288, %v281
  %329 = vst.msk [vmem:[%s3 + $0x150] sm:$0xff] %vm285, %v266
  %330 = vst.msk [vmem:[%s3 + $0x158] sm:$0xff] %vm285, %v198
  %331 = vst.msk [vmem:[%s3 + $0x160] sm:$0x3] %vm288, %v282
  %332 = vst.msk [vmem:[%s3 + $0x168] sm:$0xff] %vm285, %v267
  %333 = vst.msk [vmem:[%s3 + $0x170] sm:$0xff] %vm285, %v201
  %334 = vst.msk [vmem:[%s3 + $0x178] sm:$0x3] %vm288, %v283
  %335 = vst.msk [vmem:[%s3 + $0x180] sm:$0xff] %vm285, %v268
  %336 = vst.msk [vmem:[%s3 + $0x188] sm:$0xff] %vm285, %v204
  %337 = vst.msk [vmem:[%s3 + $0x190] sm:$0x3] %vm288, %v284
  %338 = vst.msk [vmem:[%s3 + $0x198] sm:$0xff] %vm285, %v90
  %339 = vst.msk [vmem:[%s3 + $0x1a0] sm:$0xff] %vm285, %v90
  %340 = vst.msk [vmem:[%s3 + $0x1a8] sm:$0x3] %vm288, %v90
  // Predicated region
  $region14: #{tpu_custom_call.1} parent=0 // pred_check
    _
  $region15: #{tpu_custom_call.1} parent=0 // pred_check_branch
    %342 = sbr.rel (0) target = $region17
  $region16: #{tpu_custom_call.1} parent=0 // pred_region
    _
  $region17: #{tpu_custom_call.1} parent=0 // pred_fallthru
    _
  // Predicated region
  $region18: #{tpu_custom_call.1} parent=0 // pred_check
    _
  $region19: #{tpu_custom_call.1} parent=0 // pred_check_branch
    %344 = sbr.rel (0) target = $region21
  $region20: #{tpu_custom_call.1} parent=0 // pred_region
    _
  $region21: #{tpu_custom_call.1} parent=0 // pred_fallthru
    _

</llo_original>
